<compile_context>
chip_gen: v5e
topology: v5e:2x2
jax: 0.10.0
libtpu: 0.0.40
codegen_flags: <defaults>
</compile_context>

<pallas_src>
import functools
from math import sqrt

import jax
import jax.numpy as jnp
from jax import lax
from jax.experimental import pallas as pl
from jax.experimental.pallas import tpu as pltpu


# ----------------------------------------------------------------------------
# Kernel bodies
# ----------------------------------------------------------------------------
def _attention_core(q, k, v, wo, bo, *, n_head, is_causal):
    """Per-block attention body.

    q/k/v: (Bb, T, d_model) f32 projected activations (Bb = block batch).
    wo:    (d_model, d_model) bf16 output-projection weight.
    bo:    (1, d_model) f32 output-projection bias.
    Returns (Bb, T, d_model) f32.
    """
    Bb, T, d_model = q.shape
    hd = d_model // n_head
    inv_sqrt_dk = 1.0 / sqrt(hd)

    if is_causal:
        # Hoisted: one (T, T) causal mask, reused for every head.
        row = lax.broadcasted_iota(jnp.int32, (T, T), 0)
        col = lax.broadcasted_iota(jnp.int32, (T, T), 1)
        causal_mask = (col <= row)[None]           # (1, T, T), broadcast over Bb

    # Cast MXU operands to bf16 once; all accumulation stays f32.
    q_b = q.astype(jnp.bfloat16)
    k_b = k.astype(jnp.bfloat16)
    v_b = v.astype(jnp.bfloat16)

    head_outs = []
    for h in range(n_head):                        # static unroll (n_head = 4)
        qh = q_b[:, :, h * hd:(h + 1) * hd]        # (Bb, T, hd)
        kh = k_b[:, :, h * hd:(h + 1) * hd]
        vh = v_b[:, :, h * hd:(h + 1) * hd]

        # One batched dot per head: q @ k^T without materializing a transpose.
        s = jnp.einsum("bqd,bkd->bqk", qh, kh,
                       preferred_element_type=jnp.float32) * inv_sqrt_dk
        if is_causal:
            # Large finite negative (not -inf) so a fully-masked row can never
            # produce NaN; the diagonal is always unmasked so results match.
            s = jnp.where(causal_mask, s, -1e30)

        # Softmax along keys, in f32.
        m = jnp.max(s, axis=-1, keepdims=True)
        p = jnp.exp(s - m)
        denom = jnp.sum(p, axis=-1, keepdims=True)
        inv = pl.reciprocal(denom, approx=True)    # EUP approximate reciprocal
        inv = inv * (2.0 - denom * inv)            # + one Newton step (f32)
        w = p * inv

        head_outs.append(
            jnp.einsum("bqk,bkd->bqd", w.astype(jnp.bfloat16), vh,
                       preferred_element_type=jnp.float32))

    # Head concat stays in registers: at (T, d_model) = (8, 16) the slab is a
    # fraction of one vreg tile, so no VMEM scratch round trip is needed.
    attn = jnp.concatenate(head_outs, axis=-1)     # (Bb, T, d_model) f32
    attn2 = attn.reshape(Bb * T, d_model).astype(jnp.bfloat16)
    out = jnp.dot(attn2, wo, preferred_element_type=jnp.float32) + bo
    return out.reshape(Bb, T, d_model)


def _mha_self_kernel(x_ref, w_qkv_ref, b_qkv_ref, wo_ref, bo_ref, out_ref,
                     *, n_head, is_causal, d_model):
    """Self-attention: single activation stream + fused (C, 3*d_model) QKV."""
    Bb, T, C = x_ref.shape
    x2 = x_ref[...].reshape(Bb * T, C).astype(jnp.bfloat16)
    qkv = jnp.dot(x2, w_qkv_ref[...],
                  preferred_element_type=jnp.float32) + b_qkv_ref[...]
    q = qkv[:, :d_model].reshape(Bb, T, d_model)
    k = qkv[:, d_model:2 * d_model].reshape(Bb, T, d_model)
    v = qkv[:, 2 * d_model:].reshape(Bb, T, d_model)
    out = _attention_core(q, k, v, wo_ref[...], bo_ref[...],
                          n_head=n_head, is_causal=is_causal)
    out_ref[...] = out.astype(out_ref.dtype)


def _mha_kv_shared_kernel(xq_ref, xkv_ref, wq_ref, bq_ref, w_kv_ref, b_kv_ref,
                          wo_ref, bo_ref, out_ref,
                          *, n_head, is_causal, d_model):
    """Cross-attention with shared key/value input: fused (C, 2*d_model) KV."""
    Bb, T, C = xq_ref.shape
    xq2 = xq_ref[...].reshape(Bb * T, C).astype(jnp.bfloat16)
    xkv2 = xkv_ref[...].reshape(Bb * T, C).astype(jnp.bfloat16)
    q = (jnp.dot(xq2, wq_ref[...], preferred_element_type=jnp.float32)
         + bq_ref[...]).reshape(Bb, T, d_model)
    kv = jnp.dot(xkv2, w_kv_ref[...],
                 preferred_element_type=jnp.float32) + b_kv_ref[...]
    k = kv[:, :d_model].reshape(Bb, T, d_model)
    v = kv[:, d_model:].reshape(Bb, T, d_model)
    out = _attention_core(q, k, v, wo_ref[...], bo_ref[...],
                          n_head=n_head, is_causal=is_causal)
    out_ref[...] = out.astype(out_ref.dtype)


def _mha_general_kernel(xq_ref, xk_ref, xv_ref,
                        wq_ref, bq_ref, wk_ref, bk_ref, wv_ref, bv_ref,
                        wo_ref, bo_ref, out_ref,
                        *, n_head, is_causal, d_model):
    """Fully general path (distinct query / key / value inputs)."""
    Bb, T, C = xq_ref.shape

    def proj(x_ref, w_ref, b_ref):
        x2 = x_ref[...].reshape(Bb * T, C).astype(jnp.bfloat16)
        return (jnp.dot(x2, w_ref[...], preferred_element_type=jnp.float32)
                + b_ref[...]).reshape(Bb, T, d_model)

    q = proj(xq_ref, wq_ref, bq_ref)
    k = proj(xk_ref, wk_ref, bk_ref)
    v = proj(xv_ref, wv_ref, bv_ref)
    out = _attention_core(q, k, v, wo_ref[...], bo_ref[...],
                          n_head=n_head, is_causal=is_causal)
    out_ref[...] = out.astype(out_ref.dtype)


# ----------------------------------------------------------------------------
# Host-side wrapper
# ----------------------------------------------------------------------------
def prepare_params(params):
    """Fuse and pre-cast projection weights ONCE (hoisted out of the per-call
    wrapper).  MXU weights go to bf16; biases stay f32 (added after the f32
    accumulation).  params: wq/wk/wv/wo (in, out), bq/bk/bv/bo (1, out)."""
    bf16 = jnp.bfloat16
    return {
        "wq": params["wq"].astype(bf16), "bq": params["bq"],
        "wk": params["wk"].astype(bf16), "bk": params["bk"],
        "wv": params["wv"].astype(bf16), "bv": params["bv"],
        "wo": params["wo"].astype(bf16), "bo": params["bo"],
        "w_qkv": jnp.concatenate(
            [params["wq"], params["wk"], params["wv"]], axis=1).astype(bf16),
        "b_qkv": jnp.concatenate(
            [params["bq"], params["bk"], params["bv"]], axis=1),
        "w_kv": jnp.concatenate(
            [params["wk"], params["wv"]], axis=1).astype(bf16),
        "b_kv": jnp.concatenate([params["bk"], params["bv"]], axis=1),
    }


def _default_fold_batch():
    """Fold the batch into one grid step on single-TC chips (v5e/v6e); keep a
    parallel (B,) grid on multi-TC chips (v4 / v5p / v7x) so the cores split
    the batch."""
    try:
        kind = jax.devices()[0].device_kind.lower()
    except Exception:
        return True
    multi_tc = any(tag in kind for tag in ("v7", "7x", "v5p", "v4"))
    return not multi_tc


def multihead_attention(querys, keys, values, fparams, *, n_head,
                        is_causal=False, mode=None, fold_batch=None):
    """MultiheadAttention forward (matches the PyTorch module semantics).

    fparams: output of prepare_params().
    mode: None (infer from Python object identity), "self", "kv_shared" or
          "general".  Pass explicitly when identity checks are unreliable.
    """
    B, T, C = querys.shape
    d_model = fparams["wo"].shape[0]

    if mode is None:
        if querys is keys and keys is values:
            mode = "self"
        elif keys is values:
            mode = "kv_shared"
        else:
            mode = "general"
    if fold_batch is None:
        fold_batch = _default_fold_batch()

    bb = B if fold_batch else 1          # block batch
    grid = (B // bb,)
    act_spec = pl.BlockSpec((bb, T, C), lambda b: (b, 0, 0))
    out_spec = pl.BlockSpec((bb, T, d_model), lambda b: (b, 0, 0))
    out_shape = jax.ShapeDtypeStruct((B, T, d_model), querys.dtype)
    cparams = pltpu.CompilerParams(dimension_semantics=("parallel",))

    def wspec(shape):
        return pl.BlockSpec(shape, lambda b: (0, 0))

    if mode == "self":
        kernel = functools.partial(_mha_self_kernel, n_head=n_head,
                                   is_causal=is_causal, d_model=d_model)
        return pl.pallas_call(
            kernel, out_shape=out_shape,
            grid_spec=pltpu.PrefetchScalarGridSpec(
                num_scalar_prefetch=0, grid=grid,
                in_specs=[act_spec,
                          wspec((C, 3 * d_model)), wspec((1, 3 * d_model)),
                          wspec((d_model, d_model)), wspec((1, d_model))],
                out_specs=out_spec),
            compiler_params=cparams,
        )(querys, fparams["w_qkv"], fparams["b_qkv"],
          fparams["wo"], fparams["bo"])

    if mode == "kv_shared":
        kernel = functools.partial(_mha_kv_shared_kernel, n_head=n_head,
                                   is_causal=is_causal, d_model=d_model)
        return pl.pallas_call(
            kernel, out_shape=out_shape,
            grid_spec=pltpu.PrefetchScalarGridSpec(
                num_scalar_prefetch=0, grid=grid,
                in_specs=[act_spec, act_spec,
                          wspec((C, d_model)), wspec((1, d_model)),
                          wspec((C, 2 * d_model)), wspec((1, 2 * d_model)),
                          wspec((d_model, d_model)), wspec((1, d_model))],
                out_specs=out_spec),
            compiler_params=cparams,
        )(querys, keys, fparams["wq"], fparams["bq"],
          fparams["w_kv"], fparams["b_kv"], fparams["wo"], fparams["bo"])

    kernel = functools.partial(_mha_general_kernel, n_head=n_head,
                               is_causal=is_causal, d_model=d_model)
    return pl.pallas_call(
        kernel, out_shape=out_shape,
        grid_spec=pltpu.PrefetchScalarGridSpec(
            num_scalar_prefetch=0, grid=grid,
            in_specs=[act_spec, act_spec, act_spec,
                      wspec((C, d_model)), wspec((1, d_model)),
                      wspec((C, d_model)), wspec((1, d_model)),
                      wspec((C, d_model)), wspec((1, d_model)),
                      wspec((d_model, d_model)), wspec((1, d_model))],
            out_specs=out_spec),
        compiler_params=cparams,
    )(querys, keys, values,
      fparams["wq"], fparams["bq"], fparams["wk"], fparams["bk"],
      fparams["wv"], fparams["bv"], fparams["wo"], fparams["bo"])


# ----------------------------------------------------------------------------
# Pure-JAX reference (mirrors the PyTorch module exactly, in f32)
# ----------------------------------------------------------------------------
def _reference(querys, keys, values, params, *, n_head, is_causal=False):
    B, T, C = querys.shape
    d_model = params["wq"].shape[1]
    hd = d_model // n_head

    def lin(x, w, b):
        return x @ w + b

    q = lin(querys, params["wq"], params["bq"]).reshape(B, T, n_head, hd).transpose(0, 2, 1, 3)
    k = lin(keys,   params["wk"], params["bk"]).reshape(B, T, n_head, hd).transpose(0, 2, 1, 3)
    v = lin(values, params["wv"], params["bv"]).reshape(B, T, n_head, hd).transpose(0, 2, 1, 3)

    s = jnp.einsum("bhqd,bhkd->bhqk", q, k) / sqrt(hd)
    if is_causal:
        mask = jnp.tril(jnp.ones((T, T), dtype=bool))
        s = jnp.where(mask, s, -jnp.inf)
    w = jax.nn.softmax(s, axis=-1)
    attn = jnp.einsum("bhqk,bhkd->bhqd", w, v)
    out = attn.transpose(0, 2, 1, 3).reshape(B, T, d_model)
    return lin(out, params["wo"], params["bo"])


if __name__ == "__main__":
    # Shapes consistent with the module: embedding_dim = d_model = 16,
    # n_head = 4, seq = 8, batch = 2.
    B, T, C = 2, 8, 16
    d_model = 16
    n_head = 4

    key = jax.random.PRNGKey(0)
    (k_x, k_kv, k_v2, k_wq, k_bq, k_wk, k_bk,
     k_wv, k_bv, k_wo, k_bo) = jax.random.split(key, 11)

    x = jax.random.normal(k_x, (B, T, C), dtype=jnp.float32)      # self-attn input
    x_kv = jax.random.normal(k_kv, (B, T, C), dtype=jnp.float32)  # shared k/v input
    x_v2 = jax.random.normal(k_v2, (B, T, C), dtype=jnp.float32)  # distinct v input

    scale = 1.0 / sqrt(C)
    params = {
        "wq": jax.random.uniform(k_wq, (C, d_model), jnp.float32, -scale, scale),
        "bq": jax.random.uniform(k_bq, (1, d_model), jnp.float32, -scale, scale),
        "wk": jax.random.uniform(k_wk, (C, d_model), jnp.float32, -scale, scale),
        "bk": jax.random.uniform(k_bk, (1, d_model), jnp.float32, -scale, scale),
        "wv": jax.random.uniform(k_wv, (C, d_model), jnp.float32, -scale, scale),
        "bv": jax.random.uniform(k_bv, (1, d_model), jnp.float32, -scale, scale),
        "wo": jax.random.uniform(k_wo, (d_model, d_model), jnp.float32, -scale, scale),
        "bo": jax.random.uniform(k_bo, (1, d_model), jnp.float32, -scale, scale),
    }
    fparams = prepare_params(params)   # fuse + bf16-cast weights once

    # bf16 MXU operands with f32 accumulation -> slightly looser tolerance
    # against the pure-f32 reference.
    ATOL = RTOL = 3e-2

    def check(name, out, ref):
        assert out.shape == ref.shape, name
        err = float(jnp.max(jnp.abs(out - ref)))
        assert jnp.allclose(out, ref, atol=ATOL, rtol=RTOL), (name, err)

    # 1) Self-attention (the module's actual usage), non-causal -> fused QKV.
    out = jax.block_until_ready(
        multihead_attention(x, x, x, fparams, n_head=n_head, is_causal=False))
    check("self", out, _reference(x, x, x, params, n_head=n_head, is_causal=False))

    # 2) Causal self-attention (exercises the hoisted mask).
    out_c = jax.block_until_ready(
        multihead_attention(x, x, x, fparams, n_head=n_head, is_causal=True))
    check("causal", out_c, _reference(x, x, x, params, n_head=n_head, is_causal=True))

    # 3) Cross-attention with shared key/value input (fused KV path).
    out_x = jax.block_until_ready(
        multihead_attention(x, x_kv, x_kv, fparams, n_head=n_head, is_causal=False))
    check("kv_shared", out_x,
          _reference(x, x_kv, x_kv, params, n_head=n_head, is_causal=False))

    # 4) Fully general path (all three inputs distinct).
    out_g = jax.block_until_ready(
        multihead_attention(x, x_kv, x_v2, fparams, n_head=n_head, is_causal=False))
    check("general", out_g,
          _reference(x, x_kv, x_v2, params, n_head=n_head, is_causal=False))

    # 5) Exercise the non-default batch layout too (folded vs. per-batch grid).
    out_alt = jax.block_until_ready(
        multihead_attention(x, x, x, fparams, n_head=n_head, is_causal=False,
                            fold_batch=not _default_fold_batch()))
    check("alt_fold", out_alt,
          _reference(x, x, x, params, n_head=n_head, is_causal=False))

    print("KERNEL_OK")
</pallas_src>

<mosaic_0001>
module attributes {stable_mosaic.version = 11 : i64} {
  func.func @_mha_self_kernel(%arg0: i32, %arg1: memref<2x8x16xf32, #tpu.memory_space<vmem>>, %arg2: memref<16x48xbf16, #tpu.memory_space<vmem>>, %arg3: memref<1x48xf32, #tpu.memory_space<vmem>>, %arg4: memref<16x16xbf16, #tpu.memory_space<vmem>>, %arg5: memref<1x16xf32, #tpu.memory_space<vmem>>, %arg6: memref<2x8x16xf32, #tpu.memory_space<vmem>>) attributes {dimension_semantics = [#tpu.dimension_semantics<parallel>], iteration_bounds = array<i64: 1>, scalar_prefetch = 0 : i64, scratch_operands = 0 : i64, tpu.core_type = #tpu.core_type<tc>, window_params = [{transform_indices = @transform_0, window_bounds = array<i64: 2, 8, 16>}, {pipeline_mode = #tpu.pipeline_mode<synchronous>, transform_indices = @transform_1, window_bounds = array<i64: 16, 48>}, {pipeline_mode = #tpu.pipeline_mode<synchronous>, transform_indices = @transform_2, window_bounds = array<i64: 1, 48>}, {pipeline_mode = #tpu.pipeline_mode<synchronous>, transform_indices = @transform_3, window_bounds = array<i64: 16, 16>}, {pipeline_mode = #tpu.pipeline_mode<synchronous>, transform_indices = @transform_4, window_bounds = array<i64: 1, 16>}, {transform_indices = @transform_5, window_bounds = array<i64: 2, 8, 16>}]} {
    %c0 = arith.constant 0 : index
    %c0_0 = arith.constant 0 : index
    %c0_1 = arith.constant 0 : index
    %0 = vector.load %arg1[%c0, %c0_0, %c0_1] : memref<2x8x16xf32, #tpu.memory_space<vmem>>, vector<2x8x16xf32>
    %1 = vector.shape_cast %0 : vector<2x8x16xf32> to vector<16x16xf32>
    %2 = arith.truncf %1 : vector<16x16xf32> to vector<16x16xbf16>
    %c0_2 = arith.constant 0 : index
    %c0_3 = arith.constant 0 : index
    %3 = vector.load %arg2[%c0_2, %c0_3] : memref<16x48xbf16, #tpu.memory_space<vmem>>, vector<16x48xbf16>
    %cst = arith.constant dense<0.000000e+00> : vector<16x48xf32>
    %4 = tpu.matmul %2, %3, %cst {dimension_numbers = #tpu.dot_dimension_numbers<[1], [0], [0], [1], [0, 0, 1, 1], [], []>} : vector<16x16xbf16>, vector<16x48xbf16>, vector<16x48xf32> -> vector<16x48xf32>
    %c0_4 = arith.constant 0 : index
    %c0_5 = arith.constant 0 : index
    %5 = vector.load %arg3[%c0_4, %c0_5] : memref<1x48xf32, #tpu.memory_space<vmem>>, vector<1x48xf32>
    %6 = vector.broadcast %5 : vector<1x48xf32> to vector<16x48xf32>
    %7 = arith.addf %4, %6 : vector<16x48xf32>
    %8 = vector.extract_strided_slice %7 {offsets = [0, 0], sizes = [16, 16], strides = [1, 1]} : vector<16x48xf32> to vector<16x16xf32>
    %9 = vector.shape_cast %8 : vector<16x16xf32> to vector<2x8x16xf32>
    %10 = vector.extract_strided_slice %7 {offsets = [0, 16], sizes = [16, 16], strides = [1, 1]} : vector<16x48xf32> to vector<16x16xf32>
    %11 = vector.shape_cast %10 : vector<16x16xf32> to vector<2x8x16xf32>
    %12 = vector.extract_strided_slice %7 {offsets = [0, 32], sizes = [16, 16], strides = [1, 1]} : vector<16x48xf32> to vector<16x16xf32>
    %13 = vector.shape_cast %12 : vector<16x16xf32> to vector<2x8x16xf32>
    %c0_6 = arith.constant 0 : index
    %c0_7 = arith.constant 0 : index
    %14 = vector.load %arg4[%c0_6, %c0_7] : memref<16x16xbf16, #tpu.memory_space<vmem>>, vector<16x16xbf16>
    %c0_8 = arith.constant 0 : index
    %c0_9 = arith.constant 0 : index
    %15 = vector.load %arg5[%c0_8, %c0_9] : memref<1x16xf32, #tpu.memory_space<vmem>>, vector<1x16xf32>
    %16 = arith.truncf %9 : vector<2x8x16xf32> to vector<2x8x16xbf16>
    %17 = arith.truncf %11 : vector<2x8x16xf32> to vector<2x8x16xbf16>
    %18 = arith.truncf %13 : vector<2x8x16xf32> to vector<2x8x16xbf16>
    %19 = vector.extract_strided_slice %16 {offsets = [0, 0, 0], sizes = [2, 8, 4], strides = [1, 1, 1]} : vector<2x8x16xbf16> to vector<2x8x4xbf16>
    %20 = vector.extract_strided_slice %17 {offsets = [0, 0, 0], sizes = [2, 8, 4], strides = [1, 1, 1]} : vector<2x8x16xbf16> to vector<2x8x4xbf16>
    %21 = vector.extract_strided_slice %18 {offsets = [0, 0, 0], sizes = [2, 8, 4], strides = [1, 1, 1]} : vector<2x8x16xbf16> to vector<2x8x4xbf16>
    "tpu.trace_start"() <{level = 10 : i32, message = "bqd,bkd->bqk"}> : () -> ()
    %cst_10 = arith.constant dense<0.000000e+00> : vector<2x8x8xf32>
    %22 = tpu.matmul %19, %20, %cst_10 {dimension_numbers = #tpu.dot_dimension_numbers<[2], [2], [1], [1], [0, 0, 0, 1, 1, 1], [0], [0]>} : vector<2x8x4xbf16>, vector<2x8x4xbf16>, vector<2x8x8xf32> -> vector<2x8x8xf32>
    "tpu.trace_stop"() : () -> ()
    %cst_11 = arith.constant 5.000000e-01 : f32
    %23 = vector.broadcast %cst_11 : f32 to vector<2x8x8xf32>
    %24 = arith.mulf %22, %23 : vector<2x8x8xf32>
    %cst_12 = arith.constant dense<0xFF800000> : vector<2x8xf32>
    %25 = vector.multi_reduction <maximumf>, %24, %cst_12 [2] : vector<2x8x8xf32> to vector<2x8xf32>
    %26 = vector.shape_cast %25 : vector<2x8xf32> to vector<2x8x1xf32>
    %27 = vector.broadcast %26 : vector<2x8x1xf32> to vector<2x8x8xf32>
    %28 = arith.subf %24, %27 : vector<2x8x8xf32>
    %29 = math.exp %28 : vector<2x8x8xf32>
    %cst_13 = arith.constant dense<0.000000e+00> : vector<2x8xf32>
    %30 = vector.multi_reduction <add>, %29, %cst_13 [2] : vector<2x8x8xf32> to vector<2x8xf32>
    %31 = vector.shape_cast %30 : vector<2x8xf32> to vector<2x8x1xf32>
    %32 = tpu.reciprocal %31 {approx = true} : vector<2x8x1xf32> -> vector<2x8x1xf32>
    %33 = arith.mulf %31, %32 : vector<2x8x1xf32>
    %cst_14 = arith.constant 2.000000e+00 : f32
    %34 = vector.broadcast %cst_14 : f32 to vector<2x8x1xf32>
    %35 = arith.subf %34, %33 : vector<2x8x1xf32>
    %36 = arith.mulf %32, %35 : vector<2x8x1xf32>
    %37 = vector.broadcast %36 : vector<2x8x1xf32> to vector<2x8x8xf32>
    %38 = arith.mulf %29, %37 : vector<2x8x8xf32>
    %39 = arith.truncf %38 : vector<2x8x8xf32> to vector<2x8x8xbf16>
    "tpu.trace_start"() <{level = 10 : i32, message = "bqk,bkd->bqd"}> : () -> ()
    %cst_15 = arith.constant dense<0.000000e+00> : vector<2x8x4xf32>
    %40 = tpu.matmul %39, %21, %cst_15 {dimension_numbers = #tpu.dot_dimension_numbers<[2], [1], [1], [2], [0, 0, 0, 1, 1, 2], [0], [0]>} : vector<2x8x8xbf16>, vector<2x8x4xbf16>, vector<2x8x4xf32> -> vector<2x8x4xf32>
    "tpu.trace_stop"() : () -> ()
    %41 = vector.extract_strided_slice %16 {offsets = [0, 0, 4], sizes = [2, 8, 4], strides = [1, 1, 1]} : vector<2x8x16xbf16> to vector<2x8x4xbf16>
    %42 = vector.extract_strided_slice %17 {offsets = [0, 0, 4], sizes = [2, 8, 4], strides = [1, 1, 1]} : vector<2x8x16xbf16> to vector<2x8x4xbf16>
    %43 = vector.extract_strided_slice %18 {offsets = [0, 0, 4], sizes = [2, 8, 4], strides = [1, 1, 1]} : vector<2x8x16xbf16> to vector<2x8x4xbf16>
    "tpu.trace_start"() <{level = 10 : i32, message = "bqd,bkd->bqk"}> : () -> ()
    %cst_16 = arith.constant dense<0.000000e+00> : vector<2x8x8xf32>
    %44 = tpu.matmul %41, %42, %cst_16 {dimension_numbers = #tpu.dot_dimension_numbers<[2], [2], [1], [1], [0, 0, 0, 1, 1, 1], [0], [0]>} : vector<2x8x4xbf16>, vector<2x8x4xbf16>, vector<2x8x8xf32> -> vector<2x8x8xf32>
    "tpu.trace_stop"() : () -> ()
    %cst_17 = arith.constant 5.000000e-01 : f32
    %45 = vector.broadcast %cst_17 : f32 to vector<2x8x8xf32>
    %46 = arith.mulf %44, %45 : vector<2x8x8xf32>
    %cst_18 = arith.constant dense<0xFF800000> : vector<2x8xf32>
    %47 = vector.multi_reduction <maximumf>, %46, %cst_18 [2] : vector<2x8x8xf32> to vector<2x8xf32>
    %48 = vector.shape_cast %47 : vector<2x8xf32> to vector<2x8x1xf32>
    %49 = vector.broadcast %48 : vector<2x8x1xf32> to vector<2x8x8xf32>
    %50 = arith.subf %46, %49 : vector<2x8x8xf32>
    %51 = math.exp %50 : vector<2x8x8xf32>
    %cst_19 = arith.constant dense<0.000000e+00> : vector<2x8xf32>
    %52 = vector.multi_reduction <add>, %51, %cst_19 [2] : vector<2x8x8xf32> to vector<2x8xf32>
    %53 = vector.shape_cast %52 : vector<2x8xf32> to vector<2x8x1xf32>
    %54 = tpu.reciprocal %53 {approx = true} : vector<2x8x1xf32> -> vector<2x8x1xf32>
    %55 = arith.mulf %53, %54 : vector<2x8x1xf32>
    %cst_20 = arith.constant 2.000000e+00 : f32
    %56 = vector.broadcast %cst_20 : f32 to vector<2x8x1xf32>
    %57 = arith.subf %56, %55 : vector<2x8x1xf32>
    %58 = arith.mulf %54, %57 : vector<2x8x1xf32>
    %59 = vector.broadcast %58 : vector<2x8x1xf32> to vector<2x8x8xf32>
    %60 = arith.mulf %51, %59 : vector<2x8x8xf32>
    %61 = arith.truncf %60 : vector<2x8x8xf32> to vector<2x8x8xbf16>
    "tpu.trace_start"() <{level = 10 : i32, message = "bqk,bkd->bqd"}> : () -> ()
    %cst_21 = arith.constant dense<0.000000e+00> : vector<2x8x4xf32>
    %62 = tpu.matmul %61, %43, %cst_21 {dimension_numbers = #tpu.dot_dimension_numbers<[2], [1], [1], [2], [0, 0, 0, 1, 1, 2], [0], [0]>} : vector<2x8x8xbf16>, vector<2x8x4xbf16>, vector<2x8x4xf32> -> vector<2x8x4xf32>
    "tpu.trace_stop"() : () -> ()
    %63 = vector.extract_strided_slice %16 {offsets = [0, 0, 8], sizes = [2, 8, 4], strides = [1, 1, 1]} : vector<2x8x16xbf16> to vector<2x8x4xbf16>
    %64 = vector.extract_strided_slice %17 {offsets = [0, 0, 8], sizes = [2, 8, 4], strides = [1, 1, 1]} : vector<2x8x16xbf16> to vector<2x8x4xbf16>
    %65 = vector.extract_strided_slice %18 {offsets = [0, 0, 8], sizes = [2, 8, 4], strides = [1, 1, 1]} : vector<2x8x16xbf16> to vector<2x8x4xbf16>
    "tpu.trace_start"() <{level = 10 : i32, message = "bqd,bkd->bqk"}> : () -> ()
    %cst_22 = arith.constant dense<0.000000e+00> : vector<2x8x8xf32>
    %66 = tpu.matmul %63, %64, %cst_22 {dimension_numbers = #tpu.dot_dimension_numbers<[2], [2], [1], [1], [0, 0, 0, 1, 1, 1], [0], [0]>} : vector<2x8x4xbf16>, vector<2x8x4xbf16>, vector<2x8x8xf32> -> vector<2x8x8xf32>
    "tpu.trace_stop"() : () -> ()
    %cst_23 = arith.constant 5.000000e-01 : f32
    %67 = vector.broadcast %cst_23 : f32 to vector<2x8x8xf32>
    %68 = arith.mulf %66, %67 : vector<2x8x8xf32>
    %cst_24 = arith.constant dense<0xFF800000> : vector<2x8xf32>
    %69 = vector.multi_reduction <maximumf>, %68, %cst_24 [2] : vector<2x8x8xf32> to vector<2x8xf32>
    %70 = vector.shape_cast %69 : vector<2x8xf32> to vector<2x8x1xf32>
    %71 = vector.broadcast %70 : vector<2x8x1xf32> to vector<2x8x8xf32>
    %72 = arith.subf %68, %71 : vector<2x8x8xf32>
    %73 = math.exp %72 : vector<2x8x8xf32>
    %cst_25 = arith.constant dense<0.000000e+00> : vector<2x8xf32>
    %74 = vector.multi_reduction <add>, %73, %cst_25 [2] : vector<2x8x8xf32> to vector<2x8xf32>
    %75 = vector.shape_cast %74 : vector<2x8xf32> to vector<2x8x1xf32>
    %76 = tpu.reciprocal %75 {approx = true} : vector<2x8x1xf32> -> vector<2x8x1xf32>
    %77 = arith.mulf %75, %76 : vector<2x8x1xf32>
    %cst_26 = arith.constant 2.000000e+00 : f32
    %78 = vector.broadcast %cst_26 : f32 to vector<2x8x1xf32>
    %79 = arith.subf %78, %77 : vector<2x8x1xf32>
    %80 = arith.mulf %76, %79 : vector<2x8x1xf32>
    %81 = vector.broadcast %80 : vector<2x8x1xf32> to vector<2x8x8xf32>
    %82 = arith.mulf %73, %81 : vector<2x8x8xf32>
    %83 = arith.truncf %82 : vector<2x8x8xf32> to vector<2x8x8xbf16>
    "tpu.trace_start"() <{level = 10 : i32, message = "bqk,bkd->bqd"}> : () -> ()
    %cst_27 = arith.constant dense<0.000000e+00> : vector<2x8x4xf32>
    %84 = tpu.matmul %83, %65, %cst_27 {dimension_numbers = #tpu.dot_dimension_numbers<[2], [1], [1], [2], [0, 0, 0, 1, 1, 2], [0], [0]>} : vector<2x8x8xbf16>, vector<2x8x4xbf16>, vector<2x8x4xf32> -> vector<2x8x4xf32>
    "tpu.trace_stop"() : () -> ()
    %85 = vector.extract_strided_slice %16 {offsets = [0, 0, 12], sizes = [2, 8, 4], strides = [1, 1, 1]} : vector<2x8x16xbf16> to vector<2x8x4xbf16>
    %86 = vector.extract_strided_slice %17 {offsets = [0, 0, 12], sizes = [2, 8, 4], strides = [1, 1, 1]} : vector<2x8x16xbf16> to vector<2x8x4xbf16>
    %87 = vector.extract_strided_slice %18 {offsets = [0, 0, 12], sizes = [2, 8, 4], strides = [1, 1, 1]} : vector<2x8x16xbf16> to vector<2x8x4xbf16>
    "tpu.trace_start"() <{level = 10 : i32, message = "bqd,bkd->bqk"}> : () -> ()
    %cst_28 = arith.constant dense<0.000000e+00> : vector<2x8x8xf32>
    %88 = tpu.matmul %85, %86, %cst_28 {dimension_numbers = #tpu.dot_dimension_numbers<[2], [2], [1], [1], [0, 0, 0, 1, 1, 1], [0], [0]>} : vector<2x8x4xbf16>, vector<2x8x4xbf16>, vector<2x8x8xf32> -> vector<2x8x8xf32>
    "tpu.trace_stop"() : () -> ()
    %cst_29 = arith.constant 5.000000e-01 : f32
    %89 = vector.broadcast %cst_29 : f32 to vector<2x8x8xf32>
    %90 = arith.mulf %88, %89 : vector<2x8x8xf32>
    %cst_30 = arith.constant dense<0xFF800000> : vector<2x8xf32>
    %91 = vector.multi_reduction <maximumf>, %90, %cst_30 [2] : vector<2x8x8xf32> to vector<2x8xf32>
    %92 = vector.shape_cast %91 : vector<2x8xf32> to vector<2x8x1xf32>
    %93 = vector.broadcast %92 : vector<2x8x1xf32> to vector<2x8x8xf32>
    %94 = arith.subf %90, %93 : vector<2x8x8xf32>
    %95 = math.exp %94 : vector<2x8x8xf32>
    %cst_31 = arith.constant dense<0.000000e+00> : vector<2x8xf32>
    %96 = vector.multi_reduction <add>, %95, %cst_31 [2] : vector<2x8x8xf32> to vector<2x8xf32>
    %97 = vector.shape_cast %96 : vector<2x8xf32> to vector<2x8x1xf32>
    %98 = tpu.reciprocal %97 {approx = true} : vector<2x8x1xf32> -> vector<2x8x1xf32>
    %99 = arith.mulf %97, %98 : vector<2x8x1xf32>
    %cst_32 = arith.constant 2.000000e+00 : f32
    %100 = vector.broadcast %cst_32 : f32 to vector<2x8x1xf32>
    %101 = arith.subf %100, %99 : vector<2x8x1xf32>
    %102 = arith.mulf %98, %101 : vector<2x8x1xf32>
    %103 = vector.broadcast %102 : vector<2x8x1xf32> to vector<2x8x8xf32>
    %104 = arith.mulf %95, %103 : vector<2x8x8xf32>
    %105 = arith.truncf %104 : vector<2x8x8xf32> to vector<2x8x8xbf16>
    "tpu.trace_start"() <{level = 10 : i32, message = "bqk,bkd->bqd"}> : () -> ()
    %cst_33 = arith.constant dense<0.000000e+00> : vector<2x8x4xf32>
    %106 = tpu.matmul %105, %87, %cst_33 {dimension_numbers = #tpu.dot_dimension_numbers<[2], [1], [1], [2], [0, 0, 0, 1, 1, 2], [0], [0]>} : vector<2x8x8xbf16>, vector<2x8x4xbf16>, vector<2x8x4xf32> -> vector<2x8x4xf32>
    "tpu.trace_stop"() : () -> ()
    %107 = tpu.concatenate %40, %62, %84, %106 in 2 : vector<2x8x4xf32>, vector<2x8x4xf32>, vector<2x8x4xf32>, vector<2x8x4xf32> -> vector<2x8x16xf32>
    %108 = vector.shape_cast %107 : vector<2x8x16xf32> to vector<16x16xf32>
    %109 = arith.truncf %108 : vector<16x16xf32> to vector<16x16xbf16>
    %cst_34 = arith.constant dense<0.000000e+00> : vector<16x16xf32>
    %110 = tpu.matmul %109, %14, %cst_34 {dimension_numbers = #tpu.dot_dimension_numbers<[1], [0], [0], [1], [0, 0, 1, 1], [], []>} : vector<16x16xbf16>, vector<16x16xbf16>, vector<16x16xf32> -> vector<16x16xf32>
    %111 = vector.broadcast %15 : vector<1x16xf32> to vector<16x16xf32>
    %112 = arith.addf %110, %111 : vector<16x16xf32>
    %113 = vector.shape_cast %112 : vector<16x16xf32> to vector<2x8x16xf32>
    %c0_35 = arith.constant 0 : index
    %c0_36 = arith.constant 0 : index
    %c0_37 = arith.constant 0 : index
    %114 = vector.load %arg6[%c0_35, %c0_36, %c0_37] : memref<2x8x16xf32, #tpu.memory_space<vmem>>, vector<2x8x16xf32>
    tpu.vector_store %arg6[%c0_35, %c0_36, %c0_37], %113 {strides = array<i32>} : memref<2x8x16xf32, #tpu.memory_space<vmem>>, vector<2x8x16xf32>,
    return
  }
  func.func @transform_0(%arg0: i32) -> (i32, i32, i32) {
    %c0_i32 = arith.constant 0 : i32
    %c0_i32_0 = arith.constant 0 : i32
    %c0_i32_1 = arith.constant 0 : i32
    return %arg0, %c0_i32, %c0_i32_0 : i32, i32, i32
  }
  func.func @transform_1(%arg0: i32) -> (i32, i32) {
    %c0_i32 = arith.constant 0 : i32
    %c0_i32_0 = arith.constant 0 : i32
    %c0_i32_1 = arith.constant 0 : i32
    return %c0_i32, %c0_i32_0 : i32, i32
  }
  func.func @transform_2(%arg0: i32) -> (i32, i32) {
    %c0_i32 = arith.constant 0 : i32
    %c0_i32_0 = arith.constant 0 : i32
    %c0_i32_1 = arith.constant 0 : i32
    return %c0_i32, %c0_i32_0 : i32, i32
  }
  func.func @transform_3(%arg0: i32) -> (i32, i32) {
    %c0_i32 = arith.constant 0 : i32
    %c0_i32_0 = arith.constant 0 : i32
    %c0_i32_1 = arith.constant 0 : i32
    return %c0_i32, %c0_i32_0 : i32, i32
  }
  func.func @transform_4(%arg0: i32) -> (i32, i32) {
    %c0_i32 = arith.constant 0 : i32
    %c0_i32_0 = arith.constant 0 : i32
    %c0_i32_1 = arith.constant 0 : i32
    return %c0_i32, %c0_i32_0 : i32, i32
  }
  func.func @transform_5(%arg0: i32) -> (i32, i32, i32) {
    %c0_i32 = arith.constant 0 : i32
    %c0_i32_0 = arith.constant 0 : i32
    %c0_i32_1 = arith.constant 0 : i32
    return %arg0, %c0_i32, %c0_i32_0 : i32, i32, i32
  }
}

</mosaic_0001>

<llo_original>
// kernel: tpu_custom_call.1
$region0: #{tpu_custom_call.1}
  #allocation0 [shape = 'u32[]', space=smem, size = 0x4, offset = 0x4, fixed_abs, tag = 'smem constant byte address 0x4 - core index']
  #allocation1 [shape = 'u32[72,128]{1,0:T(1,128)}', space=vmem, size = 0x9000, scoped, tag = 'internal scratch']
  %s0 = inlined_call_operand.hbm [shape: f32[2,8,16], index: 0, kind: input, shape index: {}]
  %s1 = inlined_call_operand.hbm [shape: bf16[16,48], index: 1, kind: input, shape index: {}]
  %s2 = inlined_call_operand.vmem [shape: f32[1,48], index: 2, kind: input, shape index: {}]
  %s3 = inlined_call_operand.hbm [shape: bf16[16,16], index: 3, kind: input, shape index: {}]
  %s4 = inlined_call_operand.vmem [shape: f32[1,16], index: 4, kind: input, shape index: {}]
  %s5 = inlined_call_operand.hbm [shape: f32[2,8,16], index: 5, kind: output, shape index: {}]
  %s6 = sld [smem:[#allocation0]]
  $region42: #{tpu_custom_call.1} parent=0
    _
  %s8 = ssub.s32 1, %s6
  %s9 = scalar_select 0, %s8, %s6
  $region1: #{tpu_custom_call.1} parent=0
    #allocation2 [shape = 'u8[8192]{0}', space=vmem, size = 0x2000, scoped, tag = 'input window, operand 0, single buffered']
    #allocation3 [shape = 's32[1]{0}', space=sflag, size = 0x4, scoped, tag = 'scoped memory for tpu_custom_call.1']
    #allocation4 [shape = 's32[1]{0}', space=sflag, size = 0x4, scoped, tag = 'scoped memory for tpu_custom_call.1']
    #allocation5 [shape = 'u8[4096]{0}', space=vmem, size = 0x1000, scoped, tag = 'input window, operand 1, single buffered']
    #allocation6 [shape = 's32[1]{0}', space=sflag, size = 0x4, scoped, tag = 'scoped memory for tpu_custom_call.1']
    #allocation7 [shape = 'u8[4096]{0}', space=vmem, size = 0x1000, scoped, tag = 'input window, operand 3, single buffered']
    #allocation8 [shape = 'u8[8192]{0}', space=vmem, size = 0x2000, scoped, tag = 'output window, operand 0, single buffered']
    %10 = vsyncpa [#allocation3], 0
    %11 = vsyncpa [#allocation6], 0
    %12 = vsyncpa [#allocation4], 0
    // Predicated region
    $region2: #{tpu_custom_call.1} parent=1 // pred_check
      _
    $region3: #{tpu_custom_call.1} parent=1 // pred_check_branch
      %14 = sbr.rel (0) target = $region5
    $region4: #{tpu_custom_call.1} parent=1 // pred_region
      %16 = vsyncadd [#allocation3], 0
      %s17 = sshll.u32 %s0, 4
      %s18 = int_to_ptr.hbm [resolvable:$true] %s17
      %s19 = sshll.u32 [#allocation2], 4
      %s20 = int_to_ptr.vmem [resolvable:$true] %s19
      %25 = dma.hbm_to_vmem [thread:$0]  %s18, 256, %s20, [#allocation3], 128, 128, 8
    $region5: #{tpu_custom_call.1} parent=1 // pred_fallthru
      _
    // Predicated region
    $region6: #{tpu_custom_call.1} parent=1 // pred_check
      _
    $region7: #{tpu_custom_call.1} parent=1 // pred_check_branch
      %27 = sbr.rel (0) target = $region9
    $region8: #{tpu_custom_call.1} parent=1 // pred_region
      %29 = vsyncadd [#allocation6], 0
      %s30 = sshll.u32 %s1, 4
      %s31 = int_to_ptr.hbm [resolvable:$true] %s30
      %s32 = sshll.u32 [#allocation5], 4
      %s33 = int_to_ptr.vmem [resolvable:$true] %s32
      %38 = dma.hbm_to_vmem [thread:$0]  %s31, 128, %s33, [#allocation6], 64, 64, 4
    $region9: #{tpu_custom_call.1} parent=1 // pred_fallthru
      _
    // Predicated region
    $region10: #{tpu_custom_call.1} parent=1 // pred_check
      _
    $region11: #{tpu_custom_call.1} parent=1 // pred_check_branch
      %40 = sbr.rel (0) target = $region13
    $region12: #{tpu_custom_call.1} parent=1 // pred_region
      _
    $region13: #{tpu_custom_call.1} parent=1 // pred_fallthru
      _
    // Predicated region
    $region14: #{tpu_custom_call.1} parent=1 // pred_check
      _
    $region15: #{tpu_custom_call.1} parent=1 // pred_check_branch
      %42 = sbr.rel (0) target = $region17
    $region16: #{tpu_custom_call.1} parent=1 // pred_region
      %44 = vsyncadd [#allocation6], 0
      %s45 = sshll.u32 %s3, 4
      %s46 = int_to_ptr.hbm [resolvable:$true] %s45
      %s47 = sshll.u32 [#allocation7], 4
      %s48 = int_to_ptr.vmem [resolvable:$true] %s47
      %53 = dma.hbm_to_vmem [thread:$0]  %s46, 128, %s48, [#allocation6], 64, 64, 4
    $region17: #{tpu_custom_call.1} parent=1 // pred_fallthru
      _
    // Predicated region
    $region18: #{tpu_custom_call.1} parent=1 // pred_check
      _
    $region19: #{tpu_custom_call.1} parent=1 // pred_check_branch
      %55 = sbr.rel (0) target = $region21
    $region20: #{tpu_custom_call.1} parent=1 // pred_region
      _
    $region21: #{tpu_custom_call.1} parent=1 // pred_fallthru
      _
    // Predicated region
    $region22: #{tpu_custom_call.1} parent=1 // pred_check
      _
    $region23: #{tpu_custom_call.1} parent=1 // pred_check_branch
      %57 = sbr.rel (0) target = $region25
    $region24: #{tpu_custom_call.1} parent=1 // pred_region
      %59 = dma.done [#allocation3], 256
    $region25: #{tpu_custom_call.1} parent=1 // pred_fallthru
      _
    // Predicated region
    $region26: #{tpu_custom_call.1} parent=1 // pred_check
      _
    $region27: #{tpu_custom_call.1} parent=1 // pred_check_branch
      %61 = sbr.rel (0) target = $region29
    $region28: #{tpu_custom_call.1} parent=1 // pred_region
      %63 = dma.done [#allocation6], 128
    $region29: #{tpu_custom_call.1} parent=1 // pred_fallthru
      _
    // Predicated region
    $region30: #{tpu_custom_call.1} parent=1 // pred_check
      _
    $region31: #{tpu_custom_call.1} parent=1 // pred_check_branch
      %65 = sbr.rel (0) target = $region33
    $region32: #{tpu_custom_call.1} parent=1 // pred_region
      %67 = dma.done [#allocation6], 128
    $region33: #{tpu_custom_call.1} parent=1 // pred_fallthru
      _
    %v69 = vld [vmem:[#allocation2] sm:$0xff]
    %v70 = vld [vmem:[#allocation2 + $0x8] sm:$0xff]
    %v71 = vpack.c.bf16 %v70, %v69
    %v72 = vld [vmem:[#allocation5] sm:$0xf]
    %v73 = vld [vmem:[#allocation5 + $0x4] sm:$0xf]
    %v74 = vld [vmem:[%s2] sm:$0x1]
    %v76 = vperm.slane %v74, 0
    %v80 = vunpack.c.l.b16 %v72
    %v81 = vunpack.c.l.b16 %v73
    %v82 = vpack.c.b16 %v81, %v80
    %vm84 = vcmask 130048
    %v86 = vsel %vm84, %v71, 0
    %88 = vmatpush.bf16.msra.mxu0 0
    %89 = vmatpush.bf16.msra.mxu0 0
    %90 = vmatpush.bf16.msra.mxu0 0
    %91 = vmatpush.bf16.msra.mxu0 0
    %92 = vmatpush.bf16.msra.mxu0 0
    %93 = vmatpush.bf16.msra.mxu0 0
    %94 = vmatpush.bf16.msra.mxu0 0
    %95 = vmatpush.bf16.msra.mxu0 %v82
    %96 = vmatmul.bf16.gmra.mxu0 %v86
    %v97 = vpop.f32.mrf.mxu0
    %v98 = vadd.f32 %v76, %v97
    %v99 = vpop.f32.mrf.mxu0
    %v100 = vadd.f32 %v76, %v99
    %101 = vdwg.mxu0
    %v102 = vld [vmem:[#allocation7] sm:$0xf]
    %v103 = vld [vmem:[#allocation7 + $0x4] sm:$0xf]
    %v104 = vld [vmem:[%s4] sm:$0x1]
    %v105 = vpack.c.bf16 %v98, %v98
    %v106 = vpack.c.bf16 %v100, %v100
    %v108 = vunpack.c.l.b16 %v105
    %v109 = vpack.c.b16 %v108, %v108
    %110 = vrot.lane.b32.xlu0 %v109, 112
    %v111 = vpop.permute.xlu0 %110
    %vm112 = vcmask 31744
    %v114 = vsel %vm112, %v105, 0
    %v117 = vsel %vm112, %v111, 0
    %119 = vmatpush.bf16.xpose.msra.mxu0 0
    %120 = vmatpush.bf16.xpose.msra.mxu0 0
    %121 = vmatpush.bf16.xpose.msra.mxu0 0
    %122 = vmatpush.bf16.xpose.msra.mxu0 0
    %123 = vmatpush.bf16.xpose.msra.mxu0 0
    %124 = vmatpush.bf16.xpose.msra.mxu0 0
    %125 = vmatpush.bf16.xpose.msra.mxu0 0
    %126 = vmatpush.bf16.xpose.msra.mxu0 %v117
    %127 = vmatmul.bf16.gmra.mxu0 %v114
    %v128 = vpop.f32.mrf.mxu0
    %v129 = vadd.f32 0.0, %v128
    %v130 = vpop.f32.mrf.mxu0
    %131 = vdwg.mxu0
    %v133 = vunpack.c.l.b16 %v106
    %v134 = vpack.c.b16 %v133, %v133
    %135 = vrot.lane.b32.xlu0 %v134, 112
    %v136 = vpop.permute.xlu0 %135
    %v138 = vsel %vm112, %v106, 0
    %v141 = vsel %vm112, %v136, 0
    %143 = vmatpush.bf16.xpose.msra.mxu0 0
    %144 = vmatpush.bf16.xpose.msra.mxu0 0
    %145 = vmatpush.bf16.xpose.msra.mxu0 0
    %146 = vmatpush.bf16.xpose.msra.mxu0 0
    %147 = vmatpush.bf16.xpose.msra.mxu0 0
    %148 = vmatpush.bf16.xpose.msra.mxu0 0
    %149 = vmatpush.bf16.xpose.msra.mxu0 0
    %150 = vmatpush.bf16.xpose.msra.mxu0 %v141
    %151 = vmatmul.bf16.gmra.mxu0 %v138
    %v152 = vpop.f32.mrf.mxu0
    %v153 = vadd.f32 0.0, %v152
    %v154 = vpop.f32.mrf.mxu0
    %155 = vdwg.mxu0
    %v156 = vmul.f32 %v129, 0.5
    %v157 = vmul.f32 %v153, 0.5
    %vm158 = vcmask 64512
    %v159 = vsel %vm158, %v156, -inf
    %160 = vmax.xlane.f32.xlu0 %v159
    %v161 = vpop.xlane.xlu0 %160
    %v162 = vsel %vm158, %v157, -inf
    %163 = vmax.xlane.f32.xlu0 %v162
    %v164 = vpop.xlane.xlu0 %163
    %v165 = vsub.f32 %v156, %v161
    %v166 = vsub.f32 %v157, %v164
    %v167 = vmul.f32 %v165, 1.442695
    %v168 = vpow.pop %v167
    %v169 = vmul.f32 %v166, 1.442695
    %v170 = vpow.pop %v169
    %v171 = vsel %vm158, %v168, 0.0
    %172 = vadd.xlane.f32.xlu0 %v171
    %v173 = vpop.xlane.xlu0 %172
    %v174 = vsel %vm158, %v170, 0.0
    %175 = vadd.xlane.f32.xlu0 %v174
    %v176 = vpop.xlane.xlu0 %175
    %v177 = vrcp.pop %v173
    %v178 = vrcp.pop %v176
    %v179 = vmul.f32 %v173, %v177
    %v180 = vmul.f32 %v176, %v178
    %v181 = vsub.f32 2.0, %v179
    %v182 = vsub.f32 2.0, %v180
    %v183 = vmul.f32 %v177, %v181
    %v184 = vmul.f32 %v178, %v182
    %v185 = vmul.f32 %v168, %v183
    %v186 = vmul.f32 %v170, %v184
    %v187 = vpack.c.bf16 %v185, %v185
    %v188 = vpack.c.bf16 %v186, %v186
    %189 = vrot.lane.b32.xlu0 %v109, 96
    %v190 = vpop.permute.xlu0 %189
    %v192 = vsel %vm158, %v187, 0
    %vm194 = vcmask 1043456
    %v196 = vsel %vm194, %v190, 0
    %198 = vmatpush.bf16.msra.mxu0 0
    %199 = vmatpush.bf16.msra.mxu0 0
    %200 = vmatpush.bf16.msra.mxu0 0
    %201 = vmatpush.bf16.msra.mxu0 0
    %202 = vmatpush.bf16.msra.mxu0 0
    %203 = vmatpush.bf16.msra.mxu0 0
    %204 = vmatpush.bf16.msra.mxu0 0
    %205 = vmatpush.bf16.msra.mxu0 %v196
    %206 = vmatmul.bf16.gmra.mxu0 %v192
    %v207 = vpop.f32.mrf.mxu0
    %v208 = vadd.f32 0.0, %v207
    %v209 = vpop.f32.mrf.mxu0
    %210 = vdwg.mxu0
    %211 = vrot.lane.b32.xlu0 %v134, 96
    %v212 = vpop.permute.xlu0 %211
    %v214 = vsel %vm158, %v188, 0
    %v217 = vsel %vm194, %v212, 0
    %219 = vmatpush.bf16.msra.mxu0 0
    %220 = vmatpush.bf16.msra.mxu0 0
    %221 = vmatpush.bf16.msra.mxu0 0
    %222 = vmatpush.bf16.msra.mxu0 0
    %223 = vmatpush.bf16.msra.mxu0 0
    %224 = vmatpush.bf16.msra.mxu0 0
    %225 = vmatpush.bf16.msra.mxu0 0
    %226 = vmatpush.bf16.msra.mxu0 %v217
    %227 = vmatmul.bf16.gmra.mxu0 %v214
    %v228 = vpop.f32.mrf.mxu0
    %v229 = vadd.f32 0.0, %v228
    %v230 = vpop.f32.mrf.mxu0
    %231 = vdwg.mxu0
    %232 = vrot.lane.b32.xlu0 %v109, 124
    %v233 = vpop.permute.xlu0 %232
    %234 = vrot.lane.b32.xlu0 %v109, 108
    %v235 = vpop.permute.xlu0 %234
    %v237 = vsel %vm112, %v233, 0
    %v240 = vsel %vm112, %v235, 0
    %242 = vmatpush.bf16.xpose.msra.mxu0 0
    %243 = vmatpush.bf16.xpose.msra.mxu0 0
    %244 = vmatpush.bf16.xpose.msra.mxu0 0
    %245 = vmatpush.bf16.xpose.msra.mxu0 0
    %246 = vmatpush.bf16.xpose.msra.mxu0 0
    %247 = vmatpush.bf16.xpose.msra.mxu0 0
    %248 = vmatpush.bf16.xpose.msra.mxu0 0
    %249 = vmatpush.bf16.xpose.msra.mxu0 %v240
    %250 = vmatmul.bf16.gmra.mxu0 %v237
    %v251 = vpop.f32.mrf.mxu0
    %v252 = vadd.f32 0.0, %v251
    %v253 = vpop.f32.mrf.mxu0
    %254 = vdwg.mxu0
    %255 = vrot.lane.b32.xlu0 %v134, 124
    %v256 = vpop.permute.xlu0 %255
    %257 = vrot.lane.b32.xlu0 %v134, 108
    %v258 = vpop.permute.xlu0 %257
    %v260 = vsel %vm112, %v256, 0
    %v263 = vsel %vm112, %v258, 0
    %265 = vmatpush.bf16.xpose.msra.mxu0 0
    %266 = vmatpush.bf16.xpose.msra.mxu0 0
    %267 = vmatpush.bf16.xpose.msra.mxu0 0
    %268 = vmatpush.bf16.xpose.msra.mxu0 0
    %269 = vmatpush.bf16.xpose.msra.mxu0 0
    %270 = vmatpush.bf16.xpose.msra.mxu0 0
    %271 = vmatpush.bf16.xpose.msra.mxu0 0
    %272 = vmatpush.bf16.xpose.msra.mxu0 %v263
    %273 = vmatmul.bf16.gmra.mxu0 %v260
    %v274 = vpop.f32.mrf.mxu0
    %v275 = vadd.f32 0.0, %v274
    %v276 = vpop.f32.mrf.mxu0
    %277 = vdwg.mxu0
    %v278 = vmul.f32 %v252, 0.5
    %v279 = vmul.f32 %v275, 0.5
    %v280 = vsel %vm158, %v278, -inf
    %281 = vmax.xlane.f32.xlu0 %v280
    %v282 = vpop.xlane.xlu0 %281
    %v283 = vsel %vm158, %v279, -inf
    %284 = vmax.xlane.f32.xlu0 %v283
    %v285 = vpop.xlane.xlu0 %284
    %v286 = vsub.f32 %v278, %v282
    %v287 = vsub.f32 %v279, %v285
    %v288 = vmul.f32 %v286, 1.442695
    %v289 = vpow.pop %v288
    %v290 = vmul.f32 %v287, 1.442695
    %v291 = vpow.pop %v290
    %v292 = vsel %vm158, %v289, 0.0
    %293 = vadd.xlane.f32.xlu0 %v292
    %v294 = vpop.xlane.xlu0 %293
    %v295 = vsel %vm158, %v291, 0.0
    %296 = vadd.xlane.f32.xlu0 %v295
    %v297 = vpop.xlane.xlu0 %296
    %v298 = vrcp.pop %v294
    %v299 = vrcp.pop %v297
    %v300 = vmul.f32 %v294, %v298
    %v301 = vmul.f32 %v297, %v299
    %v302 = vsub.f32 2.0, %v300
    %v303 = vsub.f32 2.0, %v301
    %v304 = vmul.f32 %v298, %v302
    %v305 = vmul.f32 %v299, %v303
    %v306 = vmul.f32 %v289, %v304
    %v307 = vmul.f32 %v291, %v305
    %v308 = vpack.c.bf16 %v306, %v306
    %v309 = vpack.c.bf16 %v307, %v307
    %310 = vrot.lane.b32.xlu0 %v109, 92
    %v311 = vpop.permute.xlu0 %310
    %v313 = vsel %vm158, %v308, 0
    %v316 = vsel %vm194, %v311, 0
    %318 = vmatpush.bf16.msra.mxu0 0
    %319 = vmatpush.bf16.msra.mxu0 0
    %320 = vmatpush.bf16.msra.mxu0 0
    %321 = vmatpush.bf16.msra.mxu0 0
    %322 = vmatpush.bf16.msra.mxu0 0
    %323 = vmatpush.bf16.msra.mxu0 0
    %324 = vmatpush.bf16.msra.mxu0 0
    %325 = vmatpush.bf16.msra.mxu0 %v316
    %326 = vmatmul.bf16.gmra.mxu0 %v313
    %v327 = vpop.f32.mrf.mxu0
    %v328 = vadd.f32 0.0, %v327
    %v329 = vpop.f32.mrf.mxu0
    %330 = vdwg.mxu0
    %331 = vrot.lane.b32.xlu0 %v134, 92
    %v332 = vpop.permute.xlu0 %331
    %v334 = vsel %vm158, %v309, 0
    %v337 = vsel %vm194, %v332, 0
    %339 = vmatpush.bf16.msra.mxu0 0
    %340 = vmatpush.bf16.msra.mxu0 0
    %341 = vmatpush.bf16.msra.mxu0 0
    %342 = vmatpush.bf16.msra.mxu0 0
    %343 = vmatpush.bf16.msra.mxu0 0
    %344 = vmatpush.bf16.msra.mxu0 0
    %345 = vmatpush.bf16.msra.mxu0 0
    %346 = vmatpush.bf16.msra.mxu0 %v337
    %347 = vmatmul.bf16.gmra.mxu0 %v334
    %v348 = vpop.f32.mrf.mxu0
    %v349 = vadd.f32 0.0, %v348
    %v350 = vpop.f32.mrf.mxu0
    %351 = vdwg.mxu0
    %352 = vrot.lane.b32.xlu0 %v109, 120
    %v353 = vpop.permute.xlu0 %352
    %354 = vrot.lane.b32.xlu0 %v109, 104
    %v355 = vpop.permute.xlu0 %354
    %v357 = vsel %vm112, %v353, 0
    %v360 = vsel %vm112, %v355, 0
    %362 = vmatpush.bf16.xpose.msra.mxu0 0
    %363 = vmatpush.bf16.xpose.msra.mxu0 0
    %364 = vmatpush.bf16.xpose.msra.mxu0 0
    %365 = vmatpush.bf16.xpose.msra.mxu0 0
    %366 = vmatpush.bf16.xpose.msra.mxu0 0
    %367 = vmatpush.bf16.xpose.msra.mxu0 0
    %368 = vmatpush.bf16.xpose.msra.mxu0 0
    %369 = vmatpush.bf16.xpose.msra.mxu0 %v360
    %370 = vmatmul.bf16.gmra.mxu0 %v357
    %v371 = vpop.f32.mrf.mxu0
    %v372 = vadd.f32 0.0, %v371
    %v373 = vpop.f32.mrf.mxu0
    %374 = vdwg.mxu0
    %375 = vrot.lane.b32.xlu0 %v134, 120
    %v376 = vpop.permute.xlu0 %375
    %377 = vrot.lane.b32.xlu0 %v134, 104
    %v378 = vpop.permute.xlu0 %377
    %v380 = vsel %vm112, %v376, 0
    %v383 = vsel %vm112, %v378, 0
    %385 = vmatpush.bf16.xpose.msra.mxu0 0
    %386 = vmatpush.bf16.xpose.msra.mxu0 0
    %387 = vmatpush.bf16.xpose.msra.mxu0 0
    %388 = vmatpush.bf16.xpose.msra.mxu0 0
    %389 = vmatpush.bf16.xpose.msra.mxu0 0
    %390 = vmatpush.bf16.xpose.msra.mxu0 0
    %391 = vmatpush.bf16.xpose.msra.mxu0 0
    %392 = vmatpush.bf16.xpose.msra.mxu0 %v383
    %393 = vmatmul.bf16.gmra.mxu0 %v380
    %v394 = vpop.f32.mrf.mxu0
    %v395 = vadd.f32 0.0, %v394
    %v396 = vpop.f32.mrf.mxu0
    %397 = vdwg.mxu0
    %v398 = vmul.f32 %v372, 0.5
    %v399 = vmul.f32 %v395, 0.5
    %v400 = vsel %vm158, %v398, -inf
    %401 = vmax.xlane.f32.xlu0 %v400
    %v402 = vpop.xlane.xlu0 %401
    %v403 = vsel %vm158, %v399, -inf
    %404 = vmax.xlane.f32.xlu0 %v403
    %v405 = vpop.xlane.xlu0 %404
    %v406 = vsub.f32 %v398, %v402
    %v407 = vsub.f32 %v399, %v405
    %v408 = vmul.f32 %v406, 1.442695
    %v409 = vpow.pop %v408
    %v410 = vmul.f32 %v407, 1.442695
    %v411 = vpow.pop %v410
    %v412 = vsel %vm158, %v409, 0.0
    %413 = vadd.xlane.f32.xlu0 %v412
    %v414 = vpop.xlane.xlu0 %413
    %v415 = vsel %vm158, %v411, 0.0
    %416 = vadd.xlane.f32.xlu0 %v415
    %v417 = vpop.xlane.xlu0 %416
    %v418 = vrcp.pop %v414
    %v419 = vrcp.pop %v417
    %v420 = vmul.f32 %v414, %v418
    %v421 = vmul.f32 %v417, %v419
    %v422 = vsub.f32 2.0, %v420
    %v423 = vsub.f32 2.0, %v421
    %v424 = vmul.f32 %v418, %v422
    %v425 = vmul.f32 %v419, %v423
    %v426 = vmul.f32 %v409, %v424
    %v427 = vmul.f32 %v411, %v425
    %v428 = vpack.c.bf16 %v426, %v426
    %v429 = vpack.c.bf16 %v427, %v427
    %430 = vrot.lane.b32.xlu0 %v109, 88
    %v431 = vpop.permute.xlu0 %430
    %v433 = vsel %vm158, %v428, 0
    %v436 = vsel %vm194, %v431, 0
    %438 = vmatpush.bf16.msra.mxu0 0
    %439 = vmatpush.bf16.msra.mxu0 0
    %440 = vmatpush.bf16.msra.mxu0 0
    %441 = vmatpush.bf16.msra.mxu0 0
    %442 = vmatpush.bf16.msra.mxu0 0
    %443 = vmatpush.bf16.msra.mxu0 0
    %444 = vmatpush.bf16.msra.mxu0 0
    %445 = vmatpush.bf16.msra.mxu0 %v436
    %446 = vmatmul.bf16.gmra.mxu0 %v433
    %v447 = vpop.f32.mrf.mxu0
    %v448 = vadd.f32 0.0, %v447
    %v449 = vpop.f32.mrf.mxu0
    %450 = vdwg.mxu0
    %451 = vrot.lane.b32.xlu0 %v134, 88
    %v452 = vpop.permute.xlu0 %451
    %v454 = vsel %vm158, %v429, 0
    %v457 = vsel %vm194, %v452, 0
    %459 = vmatpush.bf16.msra.mxu0 0
    %460 = vmatpush.bf16.msra.mxu0 0
    %461 = vmatpush.bf16.msra.mxu0 0
    %462 = vmatpush.bf16.msra.mxu0 0
    %463 = vmatpush.bf16.msra.mxu0 0
    %464 = vmatpush.bf16.msra.mxu0 0
    %465 = vmatpush.bf16.msra.mxu0 0
    %466 = vmatpush.bf16.msra.mxu0 %v457
    %467 = vmatmul.bf16.gmra.mxu0 %v454
    %v468 = vpop.f32.mrf.mxu0
    %v469 = vadd.f32 0.0, %v468
    %v470 = vpop.f32.mrf.mxu0
    %471 = vdwg.mxu0
    %472 = vrot.lane.b32.xlu0 %v109, 116
    %v473 = vpop.permute.xlu0 %472
    %474 = vrot.lane.b32.xlu0 %v109, 100
    %v475 = vpop.permute.xlu0 %474
    %v477 = vsel %vm112, %v473, 0
    %v480 = vsel %vm112, %v475, 0
    %482 = vmatpush.bf16.xpose.msra.mxu0 0
    %483 = vmatpush.bf16.xpose.msra.mxu0 0
    %484 = vmatpush.bf16.xpose.msra.mxu0 0
    %485 = vmatpush.bf16.xpose.msra.mxu0 0
    %486 = vmatpush.bf16.xpose.msra.mxu0 0
    %487 = vmatpush.bf16.xpose.msra.mxu0 0
    %488 = vmatpush.bf16.xpose.msra.mxu0 0
    %489 = vmatpush.bf16.xpose.msra.mxu0 %v480
    %490 = vmatmul.bf16.gmra.mxu0 %v477
    %v491 = vpop.f32.mrf.mxu0
    %v492 = vadd.f32 0.0, %v491
    %v493 = vpop.f32.mrf.mxu0
    %494 = vdwg.mxu0
    %495 = vrot.lane.b32.xlu0 %v134, 116
    %v496 = vpop.permute.xlu0 %495
    %497 = vrot.lane.b32.xlu0 %v134, 100
    %v498 = vpop.permute.xlu0 %497
    %v500 = vsel %vm112, %v496, 0
    %v503 = vsel %vm112, %v498, 0
    %505 = vmatpush.bf16.xpose.msra.mxu0 0
    %506 = vmatpush.bf16.xpose.msra.mxu0 0
    %507 = vmatpush.bf16.xpose.msra.mxu0 0
    %508 = vmatpush.bf16.xpose.msra.mxu0 0
    %509 = vmatpush.bf16.xpose.msra.mxu0 0
    %510 = vmatpush.bf16.xpose.msra.mxu0 0
    %511 = vmatpush.bf16.xpose.msra.mxu0 0
    %512 = vmatpush.bf16.xpose.msra.mxu0 %v503
    %513 = vmatmul.bf16.gmra.mxu0 %v500
    %v514 = vpop.f32.mrf.mxu0
    %v515 = vadd.f32 0.0, %v514
    %v516 = vpop.f32.mrf.mxu0
    %517 = vdwg.mxu0
    %v518 = vmul.f32 %v492, 0.5
    %v519 = vmul.f32 %v515, 0.5
    %v520 = vsel %vm158, %v518, -inf
    %521 = vmax.xlane.f32.xlu0 %v520
    %v522 = vpop.xlane.xlu0 %521
    %v523 = vsel %vm158, %v519, -inf
    %524 = vmax.xlane.f32.xlu0 %v523
    %v525 = vpop.xlane.xlu0 %524
    %v526 = vsub.f32 %v518, %v522
    %v527 = vsub.f32 %v519, %v525
    %v528 = vmul.f32 %v526, 1.442695
    %v529 = vpow.pop %v528
    %v530 = vmul.f32 %v527, 1.442695
    %v531 = vpow.pop %v530
    %v532 = vsel %vm158, %v529, 0.0
    %533 = vadd.xlane.f32.xlu0 %v532
    %v534 = vpop.xlane.xlu0 %533
    %v535 = vsel %vm158, %v531, 0.0
    %536 = vadd.xlane.f32.xlu0 %v535
    %v537 = vpop.xlane.xlu0 %536
    %v538 = vrcp.pop %v534
    %v539 = vrcp.pop %v537
    %v540 = vmul.f32 %v534, %v538
    %v541 = vmul.f32 %v537, %v539
    %v542 = vsub.f32 2.0, %v540
    %v543 = vsub.f32 2.0, %v541
    %v544 = vmul.f32 %v538, %v542
    %v545 = vmul.f32 %v539, %v543
    %v546 = vmul.f32 %v529, %v544
    %v547 = vmul.f32 %v531, %v545
    %v548 = vpack.c.bf16 %v546, %v546
    %v549 = vpack.c.bf16 %v547, %v547
    %550 = vrot.lane.b32.xlu0 %v109, 84
    %v551 = vpop.permute.xlu0 %550
    %v553 = vsel %vm158, %v548, 0
    %v556 = vsel %vm194, %v551, 0
    %558 = vmatpush.bf16.msra.mxu0 0
    %559 = vmatpush.bf16.msra.mxu0 0
    %560 = vmatpush.bf16.msra.mxu0 0
    %561 = vmatpush.bf16.msra.mxu0 0
    %562 = vmatpush.bf16.msra.mxu0 0
    %563 = vmatpush.bf16.msra.mxu0 0
    %564 = vmatpush.bf16.msra.mxu0 0
    %565 = vmatpush.bf16.msra.mxu0 %v556
    %566 = vmatmul.bf16.gmra.mxu0 %v553
    %v567 = vpop.f32.mrf.mxu0
    %v568 = vadd.f32 0.0, %v567
    %v569 = vpop.f32.mrf.mxu0
    %570 = vdwg.mxu0
    %571 = vrot.lane.b32.xlu0 %v134, 84
    %v572 = vpop.permute.xlu0 %571
    %v574 = vsel %vm158, %v549, 0
    %v577 = vsel %vm194, %v572, 0
    %579 = vmatpush.bf16.msra.mxu0 0
    %580 = vmatpush.bf16.msra.mxu0 0
    %581 = vmatpush.bf16.msra.mxu0 0
    %582 = vmatpush.bf16.msra.mxu0 0
    %583 = vmatpush.bf16.msra.mxu0 0
    %584 = vmatpush.bf16.msra.mxu0 0
    %585 = vmatpush.bf16.msra.mxu0 0
    %586 = vmatpush.bf16.msra.mxu0 %v577
    %587 = vmatmul.bf16.gmra.mxu0 %v574
    %v588 = vpop.f32.mrf.mxu0
    %v589 = vadd.f32 0.0, %v588
    %v590 = vpop.f32.mrf.mxu0
    %591 = vdwg.mxu0
    %594 = vrot.lane.b32.xlu0 %v328, 4
    %v595 = vpop.permute.xlu0 %594
    %596 = vrot.lane.b32.xlu0 %v349, 4
    %v597 = vpop.permute.xlu0 %596
    %602 = vrot.lane.b32.xlu0 %v448, 8
    %v603 = vpop.permute.xlu0 %602
    %604 = vrot.lane.b32.xlu0 %v469, 8
    %v605 = vpop.permute.xlu0 %604
    %610 = vrot.lane.b32.xlu0 %v568, 12
    %v611 = vpop.permute.xlu0 %610
    %612 = vrot.lane.b32.xlu0 %v589, 12
    %v613 = vpop.permute.xlu0 %612
    %v616 = vsel %vm112, %v208, %v595
    %v617 = vsel %vm112, %v229, %v597
    %v618 = vsel %vm158, %v616, %v603
    %v619 = vsel %vm158, %v617, %v605
    %vm620 = vcmask 97280
    %v621 = vsel %vm620, %v618, %v611
    %v622 = vsel %vm620, %v619, %v613
    %v623 = vpack.c.bf16 %v622, %v621
    %v625 = vperm.slane %v104, 0
    %v629 = vunpack.c.l.b16 %v102
    %v630 = vunpack.c.l.b16 %v103
    %v631 = vpack.c.b16 %v630, %v629
    %v634 = vsel %vm84, %v623, 0
    %636 = vmatpush.bf16.msra.mxu0 0
    %637 = vmatpush.bf16.msra.mxu0 0
    %638 = vmatpush.bf16.msra.mxu0 0
    %639 = vmatpush.bf16.msra.mxu0 0
    %640 = vmatpush.bf16.msra.mxu0 0
    %641 = vmatpush.bf16.msra.mxu0 0
    %642 = vmatpush.bf16.msra.mxu0 0
    %643 = vmatpush.bf16.msra.mxu0 %v631
    %644 = vmatmul.bf16.gmra.mxu0 %v634
    %v645 = vpop.f32.mrf.mxu0
    %v646 = vadd.f32 %v625, %v645
    %v647 = vpop.f32.mrf.mxu0
    %v648 = vadd.f32 %v625, %v647
    %649 = vdwg.mxu0
    %650 = vst.msk [vmem:[#allocation8] sm:$0xff] %vm84, %v646
    %651 = vst.msk [vmem:[#allocation8 + $0x8] sm:$0xff] %vm84, %v648
    // Predicated region
    $region34: #{tpu_custom_call.1} parent=1 // pred_check
      _
    $region35: #{tpu_custom_call.1} parent=1 // pred_check_branch
      %653 = sbr.rel (0) target = $region37
    $region36: #{tpu_custom_call.1} parent=1 // pred_region
      %655 = vsyncadd [#allocation4], 0
      %s656 = sshll.u32 [#allocation8], 4
      %s657 = int_to_ptr.vmem [resolvable:$true] %s656
      %s658 = sshll.u32 %s5, 4
      %s659 = int_to_ptr.hbm [resolvable:$true] %s658
      %664 = dma.vmem_to_hbm [thread:$0]  %s657, 256, %s659, [#allocation4], 128, 128, 8
    $region37: #{tpu_custom_call.1} parent=1 // pred_fallthru
      _
    // Predicated region
    $region38: #{tpu_custom_call.1} parent=1 // pred_check
      _
    $region39: #{tpu_custom_call.1} parent=1 // pred_check_branch
      %666 = sbr.rel (0) target = $region41
    $region40: #{tpu_custom_call.1} parent=1 // pred_region
      %668 = dma.done [#allocation4], 256
    $region41: #{tpu_custom_call.1} parent=1 // pred_fallthru
      _
    %669 = vsyncpa [#allocation3], 1
    %670 = vsyncpa [#allocation6], 1
    %671 = vsyncpa [#allocation4], 1

</llo_original>
